<compile_context>
chip_gen: v7x
topology: tpu7x:2x2x1
jax: 0.10.0
libtpu: 0.0.40
codegen_flags: <defaults>
</compile_context>

<pallas_src>
import functools

import jax
import jax.numpy as jnp
from jax.experimental import pallas as pl
from jax.experimental.pallas import tpu as pltpu


def _cdiv(a, b):
    return -(-a // b)


def _round_up(x, m):
    return _cdiv(x, m) * m


_TM_CAP, _TN_CAP, _TK_CAP = 512, 1024, 2048


def _default_vmem_limit():
    try:
        cap = int(getattr(pltpu.get_tpu_info(), "vmem_capacity_bytes",
                          64 * 1024 * 1024))
    except Exception:
        cap = 64 * 1024 * 1024
    # ~70% of physical VMEM, capped: ~45 MiB on v7x (64 MiB), ~90 MiB v5e/v6e.
    return max(32 * 1024 * 1024, min(cap * 7 // 10, 96 * 1024 * 1024))


_VMEM_LIMIT = _default_vmem_limit()


def _pick_tm(m, nm):
    base = _cdiv(m, nm)
    mult = 16 if base >= 16 else 8   # bf16 packs 16 rows per vreg sublane group
    return _round_up(base, mult)


def _pick_tn(n, nm):
    if n < 128:
        return n, 1                  # full-dim block (e.g. Cout=64, fc already padded)
    nn = _cdiv(n, _TN_CAP)
    tn = _round_up(_cdiv(n, nn), 128)
    nn = _cdiv(n, tn)
    # v7x dual-TC: guarantee >=2 parallel tiles when the spatial M collapses.
    if nm == 1 and nn == 1 and n >= 256 and (n // 2) % 128 == 0:
        tn, nn = n // 2, 2
    return tn, nn


# ----------------------------------------------------------------------------
# Pallas kernels
# ----------------------------------------------------------------------------

def _mm_simple_kernel(a_ref, b_ref, bias_ref, o_ref, *, relu):
    r = jnp.dot(a_ref[...], b_ref[...],
                preferred_element_type=jnp.float32) + bias_ref[...]
    if relu:
        r = jnp.maximum(r, 0.0)
    o_ref[...] = r.astype(o_ref.dtype)


def _mm_res_simple_kernel(a_ref, b_ref, bias_ref, res_ref, o_ref, *, relu):
    r = (jnp.dot(a_ref[...], b_ref[...], preferred_element_type=jnp.float32)
         + bias_ref[...] + res_ref[...].astype(jnp.float32))
    if relu:
        r = jnp.maximum(r, 0.0)
    o_ref[...] = r.astype(o_ref.dtype)


def _mm_kernel(a_ref, b_ref, bias_ref, o_ref, acc_ref, *, relu):
    k = pl.program_id(2)

    @pl.when(k == 0)
    def _():
        acc_ref[...] = jnp.zeros_like(acc_ref)

    acc_ref[...] += jnp.dot(a_ref[...], b_ref[...],
                            preferred_element_type=jnp.float32)

    @pl.when(k == pl.num_programs(2) - 1)
    def _():
        r = acc_ref[...] + bias_ref[...]
        if relu:
            r = jnp.maximum(r, 0.0)
        o_ref[...] = r.astype(o_ref.dtype)


def _mm_res_kernel(a_ref, b_ref, bias_ref, res_ref, o_ref, acc_ref, *, relu):
    k = pl.program_id(2)

    @pl.when(k == 0)
    def _():
        acc_ref[...] = jnp.zeros_like(acc_ref)

    acc_ref[...] += jnp.dot(a_ref[...], b_ref[...],
                            preferred_element_type=jnp.float32)

    @pl.when(k == pl.num_programs(2) - 1)
    def _():
        r = acc_ref[...] + bias_ref[...] + res_ref[...].astype(jnp.float32)
        if relu:
            r = jnp.maximum(r, 0.0)
        o_ref[...] = r.astype(o_ref.dtype)


def _conv_tap_kernel(*args, taps, relu):
    """taps slabs (tm,K) + weight (taps,K,tn) + bias (1,tn) -> out (tm,tn)."""
    slab_refs = args[:taps]
    w_ref = args[taps]
    bias_ref = args[taps + 1]
    o_ref = args[taps + 2]
    acc_ref = args[taps + 3]
    acc_ref[...] = jnp.dot(slab_refs[0][...], w_ref[0],
                           preferred_element_type=jnp.float32)
    for t in range(1, taps):
        acc_ref[...] += jnp.dot(slab_refs[t][...], w_ref[t],
                                preferred_element_type=jnp.float32)
    r = acc_ref[...] + bias_ref[...]
    if relu:
        r = jnp.maximum(r, 0.0)
    o_ref[...] = r.astype(o_ref.dtype)


def _max9_kernel(s0, s1, s2, s3, s4, s5, s6, s7, s8, o_ref):
    r = s0[...]
    for ref in (s1, s2, s3, s4, s5, s6, s7, s8):
        r = jnp.maximum(r, ref[...])
    o_ref[...] = r


def _gap_fc_kernel(x_ref, w_ref, bias_ref, o_ref, *, inv_hw):
    xm = (jnp.sum(x_ref[...].astype(jnp.float32), axis=1) * inv_hw)
    o_ref[...] = (jnp.dot(xm.astype(jnp.bfloat16), w_ref[...],
                          preferred_element_type=jnp.float32) + bias_ref[...])


# ----------------------------------------------------------------------------
# Pallas wrappers
# ----------------------------------------------------------------------------

def pallas_matmul(a, b, bias2, *, relu, residual=None, out_dtype=jnp.bfloat16):
    """(relu)(a @ b + bias [+ residual]).  a:(M,K) b:(K,N) bias:(1,N) -> (M,N).

    bf16 MXU operands, f32 accumulate/epilogue.  For ResNet-50 K always fits a
    single block, so the default path is a single-shot kernel on a fully
    parallel (M,N) grid; a K-reduction path with VMEM scratch exists for
    generality.
    """
    M, K = a.shape
    K2, N = b.shape
    assert K == K2

    nm = _cdiv(M, _TM_CAP)
    tm = _pick_tm(M, nm)
    Mp = tm * nm
    tn, nn = _pick_tn(N, nm)
    Np = tn * nn
    if K <= _TK_CAP:
        tk, nk = K, 1
    else:
        nk = _cdiv(K, _TK_CAP)
        tk = _round_up(_cdiv(K, nk), 256)
        nk = _cdiv(K, tk)
    Kp = tk * nk

    a_p = a if a.dtype == jnp.bfloat16 else a.astype(jnp.bfloat16)
    if (Mp, Kp) != (M, K):
        a_p = jnp.pad(a_p, ((0, Mp - M), (0, Kp - K)))
    b_p = b
    if (Kp, Np) != (K, N):
        b_p = jnp.pad(b_p, ((0, Kp - K), (0, Np - N)))
    bias_p = bias2
    if Np != N:
        bias_p = jnp.pad(bias_p, ((0, 0), (0, Np - N)))
    res_p = None
    if residual is not None:
        res_p = (residual if residual.dtype == jnp.bfloat16
                 else residual.astype(jnp.bfloat16))
        if (Mp, Np) != res_p.shape:
            res_p = jnp.pad(res_p, ((0, Mp - M), (0, Np - N)))

    if nk == 1:
        in_specs = [pl.BlockSpec((tm, tk), lambda i, j: (i, 0)),
                    pl.BlockSpec((tk, tn), lambda i, j: (0, j)),
                    pl.BlockSpec((1, tn), lambda i, j: (0, j))]
        args = [a_p, b_p, bias_p]
        if res_p is not None:
            in_specs.append(pl.BlockSpec((tm, tn), lambda i, j: (i, j)))
            args.append(res_p)
            kern = functools.partial(_mm_res_simple_kernel, relu=relu)
        else:
            kern = functools.partial(_mm_simple_kernel, relu=relu)
        out = pl.pallas_call(
            kern,
            out_shape=jax.ShapeDtypeStruct((Mp, Np), out_dtype),
            grid=(nm, nn),
            in_specs=in_specs,
            out_specs=pl.BlockSpec((tm, tn), lambda i, j: (i, j)),
            compiler_params=pltpu.CompilerParams(
                dimension_semantics=("parallel", "parallel"),
                vmem_limit_bytes=_VMEM_LIMIT),
        )(*args)
    else:
        in_specs = [pl.BlockSpec((tm, tk), lambda i, j, k: (i, k)),
                    pl.BlockSpec((tk, tn), lambda i, j, k: (k, j)),
                    pl.BlockSpec((1, tn), lambda i, j, k: (0, j))]
        args = [a_p, b_p, bias_p]
        if res_p is not None:
            in_specs.append(pl.BlockSpec((tm, tn), lambda i, j, k: (i, j)))
            args.append(res_p)
            kern = functools.partial(_mm_res_kernel, relu=relu)
        else:
            kern = functools.partial(_mm_kernel, relu=relu)
        out = pl.pallas_call(
            kern,
            out_shape=jax.ShapeDtypeStruct((Mp, Np), out_dtype),
            grid=(nm, nn, nk),
            in_specs=in_specs,
            out_specs=pl.BlockSpec((tm, tn), lambda i, j, k: (i, j)),
            scratch_shapes=[pltpu.VMEM((tm, tn), jnp.float32)],
            compiler_params=pltpu.CompilerParams(
                dimension_semantics=("parallel", "parallel", "arbitrary"),
                vmem_limit_bytes=_VMEM_LIMIT),
        )(*args)

    if (Mp, Np) != (M, N):
        out = out[:M, :N]
    return out


def pallas_conv_tap(slabs, w3, bias2, *, relu, out_dtype=jnp.bfloat16):
    """3x3 conv as 9 tap matmuls accumulated in-kernel.

    slabs: list of taps arrays (M, Cin) bf16 (shifted activation views)
    w3:    (taps, Cin, Cout) bf16 (BN folded)
    bias2: (1, Cout) f32
    """
    taps = len(slabs)
    M, K = slabs[0].shape
    taps_w, K2, N = w3.shape
    assert taps == taps_w and K == K2

    nm = _cdiv(M, _TM_CAP)
    tm = _pick_tm(M, nm)
    Mp = tm * nm
    tn, nn = _pick_tn(N, nm)
    Np = tn * nn

    if Mp != M:
        slabs = [jnp.pad(s, ((0, Mp - M), (0, 0))) for s in slabs]
    if Np != N:
        w3 = jnp.pad(w3, ((0, 0), (0, 0), (0, Np - N)))
        bias2 = jnp.pad(bias2, ((0, 0), (0, Np - N)))

    in_specs = ([pl.BlockSpec((tm, K), lambda i, j: (i, 0))] * taps
                + [pl.BlockSpec((taps, K, tn), lambda i, j: (0, 0, j)),
                   pl.BlockSpec((1, tn), lambda i, j: (0, j))])
    kern = functools.partial(_conv_tap_kernel, taps=taps, relu=relu)
    out = pl.pallas_call(
        kern,
        out_shape=jax.ShapeDtypeStruct((Mp, Np), out_dtype),
        grid=(nm, nn),
        in_specs=in_specs,
        out_specs=pl.BlockSpec((tm, tn), lambda i, j: (i, j)),
        scratch_shapes=[pltpu.VMEM((tm, tn), jnp.float32)],
        compiler_params=pltpu.CompilerParams(
            dimension_semantics=("parallel", "parallel"),
            vmem_limit_bytes=_VMEM_LIMIT),
    )(*slabs, w3, bias2)
    if (Mp, Np) != (M, N):
        out = out[:M, :N]
    return out


def pallas_maxpool_3x3_s2(x):
    """3x3 / stride 2 / pad 1 max pool on NHWC.  The 9 shifted slabs are fed as
    separate inputs; Wo is folded into the lane dim so stores are lane-dense."""
    N, H, W, C = x.shape
    k, s, p = 3, 2, 1
    Ho = (H + 2 * p - k) // s + 1
    Wo = (W + 2 * p - k) // s + 1
    xp = jnp.pad(x, ((0, 0), (p, p), (p, p), (0, 0)),
                 constant_values=-jnp.inf)
    R = N * Ho
    L = Wo * C
    tr_cap = max(8, (((1 << 20) // (2 * L)) // 8) * 8)
    nr = _cdiv(R, tr_cap)
    tr = _round_up(_cdiv(R, nr), 8)
    Rp = tr * nr
    slabs = []
    for i in range(k):
        for j in range(k):
            slab = xp[:, i:i + s * Ho:s, j:j + s * Wo:s, :].reshape(R, L)
            if Rp != R:
                slab = jnp.pad(slab, ((0, Rp - R), (0, 0)))
            slabs.append(slab)
    out = pl.pallas_call(
        _max9_kernel,
        out_shape=jax.ShapeDtypeStruct((Rp, L), x.dtype),
        grid=(nr,),
        in_specs=[pl.BlockSpec((tr, L), lambda i: (i, 0))] * 9,
        out_specs=pl.BlockSpec((tr, L), lambda i: (i, 0)),
        compiler_params=pltpu.CompilerParams(
            dimension_semantics=("parallel",),
            vmem_limit_bytes=_VMEM_LIMIT),
    )(*slabs)
    if Rp != R:
        out = out[:R]
    return out.reshape(N, Ho, Wo, C)


def pallas_gap_fc(x, w_fc, bias2):
    """Fused global average pool (NHWC -> (N,C)) + fc; one pallas_call."""
    N, H, W, C = x.shape
    x3 = x.reshape(N, H * W, C)
    Np = w_fc.shape[1]
    return pl.pallas_call(
        functools.partial(_gap_fc_kernel, inv_hw=1.0 / float(H * W)),
        out_shape=jax.ShapeDtypeStruct((N, Np), jnp.float32),
        compiler_params=pltpu.CompilerParams(vmem_limit_bytes=_VMEM_LIMIT),
    )(x3, w_fc, bias2)


# ----------------------------------------------------------------------------
# Conv layer wrappers
# ----------------------------------------------------------------------------

def _im2col(x, kh, kw, stride, pad):
    """x: NHWC (bf16) -> patches (N*Ho*Wo, kh*kw*C), ordered (ky, kx, c)."""
    if pad > 0:
        x = jnp.pad(x, ((0, 0), (pad, pad), (pad, pad), (0, 0)))
    N, H, W, C = x.shape
    Ho = (H - kh) // stride + 1
    Wo = (W - kw) // stride + 1
    cols = []
    for i in range(kh):
        for j in range(kw):
            cols.append(x[:, i:i + stride * Ho:stride, j:j + stride * Wo:stride, :])
    patches = jnp.concatenate(cols, axis=-1)
    return patches.reshape(N * Ho * Wo, kh * kw * C), (N, Ho, Wo)


def conv7x7_bn(x, p, *, stride, pad, relu):
    # TODO(synk): conv1's 7x7 still uses a one-shot JAX im2col (K=147); Cin=3
    # makes per-tap inputs lane-starved, and this runs once per forward.
    wmat, bias2 = p
    patches, (N, Ho, Wo) = _im2col(x, 7, 7, stride, pad)
    out = pallas_matmul(patches, wmat, bias2, relu=relu)
    return out.reshape(N, Ho, Wo, wmat.shape[1])


def conv1x1_bn(x, p, *, stride=1, relu, residual=None):
    wmat, bias2 = p
    if stride > 1:
        x = x[:, ::stride, ::stride, :]
    N, H, W, C = x.shape
    a = x.reshape(N * H * W, C)
    cout = wmat.shape[1]
    res2 = None
    if residual is not None:
        res2 = residual.reshape(N * H * W, cout)
    out = pallas_matmul(a, wmat, bias2, relu=relu, residual=res2)
    return out.reshape(N, H, W, cout)


def conv3x3_bn(x, p, *, stride, relu):
    w3, bias2 = p                     # (9, Cin, Cout), (1, Cout)
    N, H, W, C = x.shape
    xp = jnp.pad(x, ((0, 0), (1, 1), (1, 1), (0, 0)))
    Hp, Wp = H + 2, W + 2
    Ho = (Hp - 3) // stride + 1
    Wo = (Wp - 3) // stride + 1
    M = N * Ho * Wo
    slabs = []
    for i in range(3):
        for j in range(3):
            slabs.append(
                xp[:, i:i + stride * Ho:stride, j:j + stride * Wo:stride, :]
                .reshape(M, C))
    out = pallas_conv_tap(slabs, w3, bias2, relu=relu)
    return out.reshape(N, Ho, Wo, w3.shape[2])


# ----------------------------------------------------------------------------
# Deterministic ResNet-50 parameters (synthetic; BN folded; pre-laid-out)
# ----------------------------------------------------------------------------

def _make_conv_bn(key, cin, cout, k):
    k1, k2, k3, k4, k5 = jax.random.split(key, 5)
    fan_in = cin * k * k
    w = jax.random.normal(k1, (cout, cin, k, k), jnp.float32) * jnp.sqrt(2.0 / fan_in)
    gamma = jax.random.uniform(k2, (cout,), minval=0.5, maxval=1.5)
    beta = jax.random.normal(k3, (cout,)) * 0.1
    mean = jax.random.normal(k4, (cout,)) * 0.1
    var = jax.random.uniform(k5, (cout,), minval=0.5, maxval=1.5)
    eps = 1e-5
    scale = gamma / jnp.sqrt(var + eps)
    w_f = w * scale[:, None, None, None]          # fold BN scale into weight
    bias2 = (beta - mean * scale).reshape(1, cout).astype(jnp.float32)
    # (O, C, kh, kw) -> (kh, kw, C, O) -> (kh*kw, C, O): tap-major, chan-minor
    w_t = jnp.transpose(w_f, (2, 3, 1, 0)).reshape(k * k, cin, cout)
    return w_t.astype(jnp.bfloat16), bias2


def make_resnet50_params(key, num_classes):
    keys = jax.random.split(key, 64)
    it = iter(keys)

    w1, b1 = _make_conv_bn(next(it), 3, 64, 7)
    params = {"conv1": (w1.reshape(49 * 3, 64), b1)}     # im2col layout

    layer_cfg = [(64, 3, 1), (128, 4, 2), (256, 6, 2), (512, 3, 2)]
    inplanes = 64
    layers = []
    for width, blocks, stride in layer_cfg:
        blist = []
        for b in range(blocks):
            s = stride if b == 0 else 1
            wc1, bc1 = _make_conv_bn(next(it), inplanes, width, 1)
            wc2, bc2 = _make_conv_bn(next(it), width, width, 3)
            wc3, bc3 = _make_conv_bn(next(it), width, width * 4, 1)
            bp = {
                "conv1": (wc1[0], bc1),   # (Cin, Cout)
                "conv2": (wc2, bc2),      # (9, Cin, Cout)
                "conv3": (wc3[0], bc3),
                "stride": s,
            }
            if b == 0:                     # projection shortcut
                wd, bd = _make_conv_bn(next(it), inplanes, width * 4, 1)
                bp["downsample"] = (wd[0], bd)
            blist.append(bp)
            inplanes = width * 4
        layers.append(blist)
    params["layers"] = layers

    # fc: pre-pad N (num_classes) to the 128-lane width, bias stored (1, Np)
    kf1, kf2 = jax.random.split(next(it), 2)
    ncp = max(128, _round_up(num_classes, 128))
    w_fc = jax.random.normal(kf1, (2048, num_classes), jnp.float32) / jnp.sqrt(2048.0)
    b_fc = jax.random.normal(kf2, (num_classes,), jnp.float32) * 0.01
    params["fc"] = (
        jnp.pad(w_fc, ((0, 0), (0, ncp - num_classes))).astype(jnp.bfloat16),
        jnp.pad(b_fc, (0, ncp - num_classes)).reshape(1, ncp).astype(jnp.float32),
    )
    params["num_classes"] = num_classes
    return params


# ----------------------------------------------------------------------------
# Forward pass (== MyModel_res_2.forward)
# ----------------------------------------------------------------------------

def _bottleneck(x, bp):
    s = bp["stride"]
    out = conv1x1_bn(x, bp["conv1"], relu=True)
    out = conv3x3_bn(out, bp["conv2"], stride=s, relu=True)
    if "downsample" in bp:
        identity = conv1x1_bn(x, bp["downsample"], stride=s, relu=False)
    else:
        identity = x
    # conv3 + BN + residual add + ReLU fused into one matmul epilogue
    return conv1x1_bn(out, bp["conv3"], relu=True, residual=identity)


def my_model_res_2_forward(params, images1, images2):
    """images1 is accepted but unused, exactly like the PyTorch module."""
    del images1
    # NCHW (PyTorch) -> NHWC (lane-major channels), bf16 activations
    x = jnp.transpose(images2, (0, 2, 3, 1)).astype(jnp.bfloat16)
    x = conv7x7_bn(x, params["conv1"], stride=2, pad=3, relu=True)
    x = pallas_maxpool_3x3_s2(x)
    for blist in params["layers"]:
        for bp in blist:
            x = _bottleneck(x, bp)
    # 'flatten' node [batch, 2048] + fc fused into one kernel; slice off the
    # lane-padding of the fc output.
    w_fc, b_fc = params["fc"]
    out = pallas_gap_fc(x, w_fc, b_fc)
    return out[:, :params["num_classes"]]


# ----------------------------------------------------------------------------
# Main
# ----------------------------------------------------------------------------

if __name__ == "__main__":
    num_classes = 10
    key = jax.random.PRNGKey(0)
    kp, k1, k2 = jax.random.split(key, 3)

    params = make_resnet50_params(kp, num_classes)

    # Small but ResNet-50-compatible inputs (spatial must survive /32 downsampling).
    images1 = jax.random.normal(k1, (2, 3, 32, 32), jnp.float32)  # unused
    images2 = jax.random.normal(k2, (2, 3, 32, 32), jnp.float32)

    out = my_model_res_2_forward(params, images1, images2)
    out = jax.block_until_ready(out)
    assert out.shape == (2, num_classes), out.shape
    assert bool(jnp.all(jnp.isfinite(out)))
    print("KERNEL_OK")
</pallas_src>

<mosaic_0001>
module attributes {stable_mosaic.version = 11 : i64} {
  func.func @_mm_simple_kernel(%arg0: i32, %arg1: i32, %arg2: memref<512x147xbf16, #tpu.memory_space<vmem>>, %arg3: memref<147x64xbf16, #tpu.memory_space<vmem>>, %arg4: memref<1x64xf32, #tpu.memory_space<vmem>>, %arg5: memref<512x64xbf16, #tpu.memory_space<vmem>>) attributes {dimension_semantics = [#tpu.dimension_semantics<parallel>, #tpu.dimension_semantics<parallel>], iteration_bounds = array<i64: 1, 1>, scalar_prefetch = 0 : i64, scratch_operands = 0 : i64, tpu.core_type = #tpu.core_type<tc>, window_params = [{transform_indices = @transform_0, window_bounds = array<i64: 512, 147>}, {transform_indices = @transform_1, window_bounds = array<i64: 147, 64>}, {transform_indices = @transform_2, window_bounds = array<i64: 1, 64>}, {transform_indices = @transform_3, window_bounds = array<i64: 512, 64>}]} {
    %c0 = arith.constant 0 : index
    %c0_0 = arith.constant 0 : index
    %0 = vector.load %arg2[%c0, %c0_0] : memref<512x147xbf16, #tpu.memory_space<vmem>>, vector<512x147xbf16>
    %c0_1 = arith.constant 0 : index
    %c0_2 = arith.constant 0 : index
    %1 = vector.load %arg3[%c0_1, %c0_2] : memref<147x64xbf16, #tpu.memory_space<vmem>>, vector<147x64xbf16>
    %cst = arith.constant dense<0.000000e+00> : vector<512x64xf32>
    %2 = tpu.matmul %0, %1, %cst {dimension_numbers = #tpu.dot_dimension_numbers<[1], [0], [0], [1], [0, 0, 1, 1], [], []>} : vector<512x147xbf16>, vector<147x64xbf16>, vector<512x64xf32> -> vector<512x64xf32>
    %c0_3 = arith.constant 0 : index
    %c0_4 = arith.constant 0 : index
    %3 = vector.load %arg4[%c0_3, %c0_4] : memref<1x64xf32, #tpu.memory_space<vmem>>, vector<1x64xf32>
    %4 = vector.broadcast %3 : vector<1x64xf32> to vector<512x64xf32>
    %5 = arith.addf %2, %4 : vector<512x64xf32>
    %cst_5 = arith.constant 0.000000e+00 : f32
    %6 = vector.broadcast %cst_5 : f32 to vector<512x64xf32>
    %7 = arith.maximumf %5, %6 : vector<512x64xf32>
    %8 = arith.truncf %7 : vector<512x64xf32> to vector<512x64xbf16>
    %c0_6 = arith.constant 0 : index
    %c0_7 = arith.constant 0 : index
    %9 = vector.load %arg5[%c0_6, %c0_7] : memref<512x64xbf16, #tpu.memory_space<vmem>>, vector<512x64xbf16>
    tpu.vector_store %arg5[%c0_6, %c0_7], %8 {strides = array<i32>} : memref<512x64xbf16, #tpu.memory_space<vmem>>, vector<512x64xbf16>,
    return
  }
  func.func @transform_0(%arg0: i32, %arg1: i32) -> (i32, i32) {
    %c0_i32 = arith.constant 0 : i32
    %c0_i32_0 = arith.constant 0 : i32
    return %arg0, %c0_i32 : i32, i32
  }
  func.func @transform_1(%arg0: i32, %arg1: i32) -> (i32, i32) {
    %c0_i32 = arith.constant 0 : i32
    %c0_i32_0 = arith.constant 0 : i32
    return %c0_i32, %arg1 : i32, i32
  }
  func.func @transform_2(%arg0: i32, %arg1: i32) -> (i32, i32) {
    %c0_i32 = arith.constant 0 : i32
    %c0_i32_0 = arith.constant 0 : i32
    return %c0_i32, %arg1 : i32, i32
  }
  func.func @transform_3(%arg0: i32, %arg1: i32) -> (i32, i32) {
    %c0_i32 = arith.constant 0 : i32
    return %arg0, %arg1 : i32, i32
  }
}

</mosaic_0001>

<llo_original>
// kernel: tpu_custom_call.1
$region0: #{tpu_custom_call.1}
  #allocation0 [shape = 'u32[]', space=smem, size = 0x4, offset = 0x4, fixed_abs, tag = 'smem constant byte address 0x4 - core index']
  #allocation1 [shape = 'u32[144,128]{1,0:T(1,128)}', space=vmem, size = 0x12000, scoped, tag = 'internal scratch']
  %s0 = inlined_call_operand.vmem [shape: bf16[512,147], index: 0, kind: input, shape index: {}]
  %s1 = inlined_call_operand.vmem [shape: bf16[147,64], index: 1, kind: input, shape index: {}]
  %s2 = inlined_call_operand.vmem [shape: f32[1,64], index: 2, kind: input, shape index: {}]
  %s3 = inlined_call_operand.vmem [shape: bf16[512,64], index: 3, kind: output, shape index: {}]
  %s4 = sld [smem:[#allocation0]]
  $region22: #{tpu_custom_call.1} parent=0
    _
  %s6 = ssub.s32 1, %s4
  %s7 = scalar_select 0, %s6, %s4
  // Predicated region
  $region2: #{tpu_custom_call.1} parent=0 // pred_check
    _
  $region3: #{tpu_custom_call.1} parent=0 // pred_check_branch
    %9 = sbr.rel (0) target = $region5
  $region4: #{tpu_custom_call.1} parent=0 // pred_region
    _
  $region5: #{tpu_custom_call.1} parent=0 // pred_fallthru
    _
  // Predicated region
  $region6: #{tpu_custom_call.1} parent=0 // pred_check
    _
  $region7: #{tpu_custom_call.1} parent=0 // pred_check_branch
    %11 = sbr.rel (0) target = $region9
  $region8: #{tpu_custom_call.1} parent=0 // pred_region
    _
  $region9: #{tpu_custom_call.1} parent=0 // pred_fallthru
    _
  // Predicated region
  $region10: #{tpu_custom_call.1} parent=0 // pred_check
    _
  $region11: #{tpu_custom_call.1} parent=0 // pred_check_branch
    %13 = sbr.rel (0) target = $region13
  $region12: #{tpu_custom_call.1} parent=0 // pred_region
    _
  $region13: #{tpu_custom_call.1} parent=0 // pred_fallthru
    _
  %v15 = vld [vmem:[%s0] sm:$0xff]
  %v16 = vld [vmem:[%s0 + $0x8] sm:$0xff]
  %v17 = vld [vmem:[%s0 + $0x10] sm:$0xff]
  %v18 = vld [vmem:[%s0 + $0x18] sm:$0xff]
  %v19 = vld [vmem:[%s0 + $0x20] sm:$0xff]
  %v20 = vld [vmem:[%s0 + $0x28] sm:$0xff]
  %v21 = vld [vmem:[%s0 + $0x30] sm:$0xff]
  %v22 = vld [vmem:[%s0 + $0x38] sm:$0xff]
  %v23 = vld [vmem:[%s0 + $0x40] sm:$0xff]
  %v24 = vld [vmem:[%s0 + $0x48] sm:$0xff]
  %v25 = vld [vmem:[%s0 + $0x50] sm:$0xff]
  %v26 = vld [vmem:[%s0 + $0x58] sm:$0xff]
  %v27 = vld [vmem:[%s0 + $0x60] sm:$0xff]
  %v28 = vld [vmem:[%s0 + $0x68] sm:$0xff]
  %v29 = vld [vmem:[%s0 + $0x70] sm:$0xff]
  %v30 = vld [vmem:[%s0 + $0x78] sm:$0xff]
  %v31 = vld [vmem:[%s0 + $0x80] sm:$0xff]
  %v32 = vld [vmem:[%s0 + $0x88] sm:$0xff]
  %v33 = vld [vmem:[%s0 + $0x90] sm:$0xff]
  %v34 = vld [vmem:[%s0 + $0x98] sm:$0xff]
  %v35 = vld [vmem:[%s0 + $0xa0] sm:$0xff]
  %v36 = vld [vmem:[%s0 + $0xa8] sm:$0xff]
  %v37 = vld [vmem:[%s0 + $0xb0] sm:$0xff]
  %v38 = vld [vmem:[%s0 + $0xb8] sm:$0xff]
  %v39 = vld [vmem:[%s0 + $0xc0] sm:$0xff]
  %v40 = vld [vmem:[%s0 + $0xc8] sm:$0xff]
  %v41 = vld [vmem:[%s0 + $0xd0] sm:$0xff]
  %v42 = vld [vmem:[%s0 + $0xd8] sm:$0xff]
  %v43 = vld [vmem:[%s0 + $0xe0] sm:$0xff]
  %v44 = vld [vmem:[%s0 + $0xe8] sm:$0xff]
  %v45 = vld [vmem:[%s0 + $0xf0] sm:$0xff]
  %v46 = vld [vmem:[%s0 + $0xf8] sm:$0xff]
  %v47 = vld [vmem:[%s0 + $0x100] sm:$0xff]
  %v48 = vld [vmem:[%s0 + $0x108] sm:$0xff]
  %v49 = vld [vmem:[%s0 + $0x110] sm:$0xff]
  %v50 = vld [vmem:[%s0 + $0x118] sm:$0xff]
  %v51 = vld [vmem:[%s0 + $0x120] sm:$0xff]
  %v52 = vld [vmem:[%s0 + $0x128] sm:$0xff]
  %v53 = vld [vmem:[%s0 + $0x130] sm:$0xff]
  %v54 = vld [vmem:[%s0 + $0x138] sm:$0xff]
  %v55 = vld [vmem:[%s0 + $0x140] sm:$0xff]
  %v56 = vld [vmem:[%s0 + $0x148] sm:$0xff]
  %v57 = vld [vmem:[%s0 + $0x150] sm:$0xff]
  %v58 = vld [vmem:[%s0 + $0x158] sm:$0xff]
  %v59 = vld [vmem:[%s0 + $0x160] sm:$0xff]
  %v60 = vld [vmem:[%s0 + $0x168] sm:$0xff]
  %v61 = vld [vmem:[%s0 + $0x170] sm:$0xff]
  %v62 = vld [vmem:[%s0 + $0x178] sm:$0xff]
  %v63 = vld [vmem:[%s0 + $0x180] sm:$0xff]
  %v64 = vld [vmem:[%s0 + $0x188] sm:$0xff]
  %v65 = vld [vmem:[%s0 + $0x190] sm:$0xff]
  %v66 = vld [vmem:[%s0 + $0x198] sm:$0xff]
  %v67 = vld [vmem:[%s0 + $0x1a0] sm:$0xff]
  %v68 = vld [vmem:[%s0 + $0x1a8] sm:$0xff]
  %v69 = vld [vmem:[%s0 + $0x1b0] sm:$0xff]
  %v70 = vld [vmem:[%s0 + $0x1b8] sm:$0xff]
  %v71 = vld [vmem:[%s0 + $0x1c0] sm:$0xff]
  %v72 = vld [vmem:[%s0 + $0x1c8] sm:$0xff]
  %v73 = vld [vmem:[%s0 + $0x1d0] sm:$0xff]
  %v74 = vld [vmem:[%s0 + $0x1d8] sm:$0xff]
  %v75 = vld [vmem:[%s0 + $0x1e0] sm:$0xff]
  %v76 = vld [vmem:[%s0 + $0x1e8] sm:$0xff]
  %v77 = vld [vmem:[%s0 + $0x1f0] sm:$0xff]
  %v78 = vld [vmem:[%s0 + $0x1f8] sm:$0xff]
  %v79 = vld [vmem:[%s1] sm:$0xf]
  %v80 = vld [vmem:[%s1 + $0x4] sm:$0xf]
  %v81 = vld [vmem:[%s1 + $0x8] sm:$0xf]
  %v82 = vld [vmem:[%s1 + $0xc] sm:$0xf]
  %v83 = vld [vmem:[%s1 + $0x10] sm:$0xf]
  %v84 = vld [vmem:[%s1 + $0x14] sm:$0xf]
  %v85 = vld [vmem:[%s1 + $0x18] sm:$0xf]
  %v86 = vld [vmem:[%s1 + $0x1c] sm:$0xf]
  %v87 = vld [vmem:[%s1 + $0x20] sm:$0xf]
  %v88 = vld [vmem:[%s1 + $0x24] sm:$0xf]
  %v89 = vld [vmem:[%s1 + $0x28] sm:$0xf]
  %v90 = vld [vmem:[%s1 + $0x2c] sm:$0xf]
  %v91 = vld [vmem:[%s1 + $0x30] sm:$0xf]
  %v92 = vld [vmem:[%s1 + $0x34] sm:$0xf]
  %v93 = vld [vmem:[%s1 + $0x38] sm:$0xf]
  %v94 = vld [vmem:[%s1 + $0x3c] sm:$0xf]
  %v95 = vld [vmem:[%s1 + $0x40] sm:$0xf]
  %v96 = vld [vmem:[%s1 + $0x44] sm:$0xf]
  %v97 = vld [vmem:[%s1 + $0x48] sm:$0x3]
  %v98 = vld [vmem:[%s2] sm:$0x1]
  %v100 = vlaneseq
  %v101 = vshrl.u32 %v100, 7
  %v102 = vsub.s32 0, %v101
  %v103 = vrot.slane %v98, %v102
  %v169 = vunpack.c.l.b16 %v15
  %v170 = vunpack.c.h.b16 %v15
  %v171 = vunpack.c.l.b16 %v16
  %v172 = vunpack.c.h.b16 %v16
  %v173 = vunpack.c.l.b16 %v17
  %v174 = vunpack.c.h.b16 %v17
  %v175 = vunpack.c.l.b16 %v18
  %v176 = vunpack.c.h.b16 %v18
  %v177 = vunpack.c.l.b16 %v19
  %v178 = vunpack.c.h.b16 %v19
  %v179 = vunpack.c.l.b16 %v20
  %v180 = vunpack.c.h.b16 %v20
  %v181 = vunpack.c.l.b16 %v21
  %v182 = vunpack.c.h.b16 %v21
  %v183 = vunpack.c.l.b16 %v22
  %v184 = vunpack.c.h.b16 %v22
  %v185 = vunpack.c.l.b16 %v23
  %v186 = vunpack.c.h.b16 %v23
  %v187 = vunpack.c.l.b16 %v24
  %v188 = vunpack.c.h.b16 %v24
  %v189 = vunpack.c.l.b16 %v25
  %v190 = vunpack.c.h.b16 %v25
  %v191 = vunpack.c.l.b16 %v26
  %v192 = vunpack.c.h.b16 %v26
  %v193 = vunpack.c.l.b16 %v27
  %v194 = vunpack.c.h.b16 %v27
  %v195 = vunpack.c.l.b16 %v28
  %v196 = vunpack.c.h.b16 %v28
  %v197 = vunpack.c.l.b16 %v29
  %v198 = vunpack.c.h.b16 %v29
  %v199 = vunpack.c.l.b16 %v30
  %v200 = vunpack.c.h.b16 %v30
  %v201 = vunpack.c.l.b16 %v31
  %v202 = vunpack.c.h.b16 %v31
  %v203 = vunpack.c.l.b16 %v32
  %v204 = vunpack.c.h.b16 %v32
  %v205 = vunpack.c.l.b16 %v33
  %v206 = vunpack.c.h.b16 %v33
  %v207 = vunpack.c.l.b16 %v34
  %v208 = vunpack.c.h.b16 %v34
  %v209 = vunpack.c.l.b16 %v35
  %v210 = vunpack.c.h.b16 %v35
  %v211 = vunpack.c.l.b16 %v36
  %v212 = vunpack.c.h.b16 %v36
  %v213 = vunpack.c.l.b16 %v37
  %v214 = vunpack.c.h.b16 %v37
  %v215 = vunpack.c.l.b16 %v38
  %v216 = vunpack.c.h.b16 %v38
  %v217 = vunpack.c.l.b16 %v39
  %v218 = vunpack.c.h.b16 %v39
  %v219 = vunpack.c.l.b16 %v40
  %v220 = vunpack.c.h.b16 %v40
  %v221 = vunpack.c.l.b16 %v41
  %v222 = vunpack.c.h.b16 %v41
  %v223 = vunpack.c.l.b16 %v42
  %v224 = vunpack.c.h.b16 %v42
  %v225 = vunpack.c.l.b16 %v43
  %v226 = vunpack.c.h.b16 %v43
  %v227 = vunpack.c.l.b16 %v44
  %v228 = vunpack.c.h.b16 %v44
  %v229 = vunpack.c.l.b16 %v45
  %v230 = vunpack.c.h.b16 %v45
  %v231 = vunpack.c.l.b16 %v46
  %v232 = vunpack.c.h.b16 %v46
  %v233 = vunpack.c.l.b16 %v47
  %v234 = vunpack.c.h.b16 %v47
  %v235 = vunpack.c.l.b16 %v48
  %v236 = vunpack.c.h.b16 %v48
  %v237 = vunpack.c.l.b16 %v49
  %v238 = vunpack.c.h.b16 %v49
  %v239 = vunpack.c.l.b16 %v50
  %v240 = vunpack.c.h.b16 %v50
  %v241 = vunpack.c.l.b16 %v51
  %v242 = vunpack.c.h.b16 %v51
  %v243 = vunpack.c.l.b16 %v52
  %v244 = vunpack.c.h.b16 %v52
  %v245 = vunpack.c.l.b16 %v53
  %v246 = vunpack.c.h.b16 %v53
  %v247 = vunpack.c.l.b16 %v54
  %v248 = vunpack.c.h.b16 %v54
  %v249 = vunpack.c.l.b16 %v55
  %v250 = vunpack.c.h.b16 %v55
  %v251 = vunpack.c.l.b16 %v56
  %v252 = vunpack.c.h.b16 %v56
  %v253 = vunpack.c.l.b16 %v57
  %v254 = vunpack.c.h.b16 %v57
  %v255 = vunpack.c.l.b16 %v58
  %v256 = vunpack.c.h.b16 %v58
  %v257 = vunpack.c.l.b16 %v59
  %v258 = vunpack.c.h.b16 %v59
  %v259 = vunpack.c.l.b16 %v60
  %v260 = vunpack.c.h.b16 %v60
  %v261 = vunpack.c.l.b16 %v61
  %v262 = vunpack.c.h.b16 %v61
  %v263 = vunpack.c.l.b16 %v62
  %v264 = vunpack.c.h.b16 %v62
  %v265 = vunpack.c.l.b16 %v63
  %v266 = vunpack.c.h.b16 %v63
  %v267 = vunpack.c.l.b16 %v64
  %v268 = vunpack.c.h.b16 %v64
  %v269 = vunpack.c.l.b16 %v65
  %v270 = vunpack.c.h.b16 %v65
  %v271 = vunpack.c.l.b16 %v66
  %v272 = vunpack.c.h.b16 %v66
  %v273 = vunpack.c.l.b16 %v67
  %v274 = vunpack.c.h.b16 %v67
  %v275 = vunpack.c.l.b16 %v68
  %v276 = vunpack.c.h.b16 %v68
  %v277 = vunpack.c.l.b16 %v69
  %v278 = vunpack.c.h.b16 %v69
  %v279 = vunpack.c.l.b16 %v70
  %v280 = vunpack.c.h.b16 %v70
  %v281 = vunpack.c.l.b16 %v71
  %v282 = vunpack.c.h.b16 %v71
  %v283 = vunpack.c.l.b16 %v72
  %v284 = vunpack.c.h.b16 %v72
  %v285 = vunpack.c.l.b16 %v73
  %v286 = vunpack.c.h.b16 %v73
  %v287 = vunpack.c.l.b16 %v74
  %v288 = vunpack.c.h.b16 %v74
  %v289 = vunpack.c.l.b16 %v75
  %v290 = vunpack.c.h.b16 %v75
  %v291 = vunpack.c.l.b16 %v76
  %v292 = vunpack.c.h.b16 %v76
  %v293 = vunpack.c.l.b16 %v77
  %v294 = vunpack.c.h.b16 %v77
  %v295 = vunpack.c.l.b16 %v78
  %v296 = vunpack.c.h.b16 %v78
  %v297 = vpack.c.b16 %v171, %v169
  %v298 = vpack.c.b16 %v172, %v170
  %v299 = vpack.c.b16 %v175, %v173
  %v300 = vpack.c.b16 %v176, %v174
  %v301 = vpack.c.b16 %v179, %v177
  %v302 = vpack.c.b16 %v180, %v178
  %v303 = vpack.c.b16 %v183, %v181
  %v304 = vpack.c.b16 %v184, %v182
  %v305 = vpack.c.b16 %v187, %v185
  %v306 = vpack.c.b16 %v188, %v186
  %v307 = vpack.c.b16 %v191, %v189
  %v308 = vpack.c.b16 %v192, %v190
  %v309 = vpack.c.b16 %v195, %v193
  %v310 = vpack.c.b16 %v196, %v194
  %v311 = vpack.c.b16 %v199, %v197
  %v312 = vpack.c.b16 %v200, %v198
  %v313 = vpack.c.b16 %v203, %v201
  %v314 = vpack.c.b16 %v204, %v202
  %v315 = vpack.c.b16 %v207, %v205
  %v316 = vpack.c.b16 %v208, %v206
  %v317 = vpack.c.b16 %v211, %v209
  %v318 = vpack.c.b16 %v212, %v210
  %v319 = vpack.c.b16 %v215, %v213
  %v320 = vpack.c.b16 %v216, %v214
  %v321 = vpack.c.b16 %v219, %v217
  %v322 = vpack.c.b16 %v220, %v218
  %v323 = vpack.c.b16 %v223, %v221
  %v324 = vpack.c.b16 %v224, %v222
  %v325 = vpack.c.b16 %v227, %v225
  %v326 = vpack.c.b16 %v228, %v226
  %v327 = vpack.c.b16 %v231, %v229
  %v328 = vpack.c.b16 %v232, %v230
  %v329 = vpack.c.b16 %v235, %v233
  %v330 = vpack.c.b16 %v236, %v234
  %v331 = vpack.c.b16 %v239, %v237
  %v332 = vpack.c.b16 %v240, %v238
  %v333 = vpack.c.b16 %v243, %v241
  %v334 = vpack.c.b16 %v244, %v242
  %v335 = vpack.c.b16 %v247, %v245
  %v336 = vpack.c.b16 %v248, %v246
  %v337 = vpack.c.b16 %v251, %v249
  %v338 = vpack.c.b16 %v252, %v250
  %v339 = vpack.c.b16 %v255, %v253
  %v340 = vpack.c.b16 %v256, %v254
  %v341 = vpack.c.b16 %v259, %v257
  %v342 = vpack.c.b16 %v260, %v258
  %v343 = vpack.c.b16 %v263, %v261
  %v344 = vpack.c.b16 %v264, %v262
  %v345 = vpack.c.b16 %v267, %v265
  %v346 = vpack.c.b16 %v268, %v266
  %v347 = vpack.c.b16 %v271, %v269
  %v348 = vpack.c.b16 %v272, %v270
  %v349 = vpack.c.b16 %v275, %v273
  %v350 = vpack.c.b16 %v276, %v274
  %v351 = vpack.c.b16 %v279, %v277
  %v352 = vpack.c.b16 %v280, %v278
  %v353 = vpack.c.b16 %v283, %v281
  %v354 = vpack.c.b16 %v284, %v282
  %v355 = vpack.c.b16 %v287, %v285
  %v356 = vpack.c.b16 %v288, %v286
  %v357 = vpack.c.b16 %v291, %v289
  %v358 = vpack.c.b16 %v292, %v290
  %v359 = vpack.c.b16 %v295, %v293
  %v360 = vpack.c.b16 %v296, %v294
  %v412 = vunpack.c.l.b16 %v79
  %v413 = vunpack.c.l.b16 %v80
  %v414 = vunpack.c.l.b16 %v81
  %v415 = vunpack.c.l.b16 %v82
  %v416 = vunpack.c.l.b16 %v83
  %v417 = vunpack.c.l.b16 %v84
  %v418 = vunpack.c.l.b16 %v85
  %v419 = vunpack.c.l.b16 %v86
  %v420 = vunpack.c.l.b16 %v87
  %v421 = vunpack.c.l.b16 %v88
  %v422 = vunpack.c.l.b16 %v89
  %v423 = vunpack.c.l.b16 %v90
  %v424 = vunpack.c.l.b16 %v91
  %v425 = vunpack.c.l.b16 %v92
  %v426 = vunpack.c.l.b16 %v93
  %v427 = vunpack.c.l.b16 %v94
  %v428 = vunpack.c.l.b16 %v95
  %v429 = vunpack.c.l.b16 %v96
  %v430 = vunpack.c.l.b16 %v97
  %v431 = vpack.c.b16 %v413, %v412
  %v432 = vpack.c.b16 %v415, %v414
  %v433 = vpack.c.b16 %v417, %v416
  %v434 = vpack.c.b16 %v419, %v418
  %v435 = vpack.c.b16 %v421, %v420
  %v436 = vpack.c.b16 %v423, %v422
  %v437 = vpack.c.b16 %v425, %v424
  %v438 = vpack.c.b16 %v427, %v426
  %v439 = vpack.c.b16 %v429, %v428
  %v440 = vpack.c.b16 %v430, %v430
  %vm450 = vcmask 154624
  %v452 = vsel %vm450, %v298, 0
  %v455 = vsel %vm450, %v300, 0
  %v458 = vsel %vm450, %v302, 0
  %v461 = vsel %vm450, %v304, 0
  %v464 = vsel %vm450, %v306, 0
  %v467 = vsel %vm450, %v308, 0
  %v470 = vsel %vm450, %v310, 0
  %v473 = vsel %vm450, %v312, 0
  %v476 = vsel %vm450, %v314, 0
  %v479 = vsel %vm450, %v316, 0
  %v482 = vsel %vm450, %v318, 0
  %v485 = vsel %vm450, %v320, 0
  %v488 = vsel %vm450, %v322, 0
  %v491 = vsel %vm450, %v324, 0
  %v494 = vsel %vm450, %v326, 0
  %v497 = vsel %vm450, %v328, 0
  %v500 = vsel %vm450, %v330, 0
  %v503 = vsel %vm450, %v332, 0
  %v506 = vsel %vm450, %v334, 0
  %v509 = vsel %vm450, %v336, 0
  %v512 = vsel %vm450, %v338, 0
  %v515 = vsel %vm450, %v340, 0
  %v518 = vsel %vm450, %v342, 0
  %v521 = vsel %vm450, %v344, 0
  %v524 = vsel %vm450, %v346, 0
  %v527 = vsel %vm450, %v348, 0
  %v530 = vsel %vm450, %v350, 0
  %v533 = vsel %vm450, %v352, 0
  %v536 = vsel %vm450, %v354, 0
  %v539 = vsel %vm450, %v356, 0
  %v542 = vsel %vm450, %v358, 0
  %v545 = vsel %vm450, %v360, 0
  %vm547 = vcmask 1040384
  %vm548 = vcmask 1041408
  %v549 = vsel %vm547, 4294967295, 65535
  %v550 = vsel %vm548, %v549, 0
  %v552 = vand.u32 %v440, %v550
  %554 = vmatprep.subr.bf16.mxu0 0
  %555 = vmatpush1.bf16.msra.mxu0 %v431
  %556 = vmatprep.subr.bf16.mxu0 0
  %557 = vmatpush1.bf16.msra.mxu0 %v432
  %558 = vmatprep.subr.bf16.mxu0 0
  %559 = vmatpush1.bf16.msra.mxu0 %v433
  %560 = vmatprep.subr.bf16.mxu0 0
  %561 = vmatpush1.bf16.msra.mxu0 %v434
  %562 = vmatprep.subr.bf16.mxu0 0
  %563 = vmatpush1.bf16.msra.mxu0 %v435
  %564 = vmatprep.subr.bf16.mxu0 0
  %565 = vmatpush1.bf16.msra.mxu0 %v436
  %566 = vmatprep.subr.bf16.mxu0 0
  %567 = vmatpush1.bf16.msra.mxu0 %v437
  %568 = vmatprep.subr.bf16.mxu0 0
  %569 = vmatpush1.bf16.msra.mxu0 %v438
  %570 = vmatprep.subr.bf16.mxu0 0
  %571 = vmatpush1.bf16.msra.mxu0 %v439
  %572 = vmatprep.subr.bf16.mxu0 0
  %573 = vmatpush1.bf16.msra.mxu0 %v552
  %574 = vmatprep.subr.bf16.mxu0 0
  %575 = vmatpush1.bf16.msra.mxu0 0
  %576 = vmatprep.subr.bf16.mxu0 0
  %577 = vmatpush1.bf16.msra.mxu0 0
  %578 = vmatprep.subr.bf16.mxu0 0
  %579 = vmatpush1.bf16.msra.mxu0 0
  %580 = vmatprep.subr.bf16.mxu0 0
  %581 = vmatpush1.bf16.msra.mxu0 0
  %582 = vmatprep.subr.bf16.mxu0 0
  %583 = vmatpush1.bf16.msra.mxu0 0
  %584 = vmatprep.subr.bf16.mxu0 0
  %585 = vmatpush1.bf16.msra.mxu0 0
  %586 = vmatprep.mubr.bf16.mxu0 %v452
  %587 = vmatmul.mubr.bf16.gmra.mrb[0].mxu0 %v297
  %v588 = vpop.f32.mrb[0].mxu0
  %v589 = vadd.f32 %v103, %v588
  %v590 = vpop.f32.mrb[0].mxu0
  %v591 = vpop.f32.mrb[0].mxu0
  %v592 = vadd.f32 %v103, %v591
  %v593 = vpop.f32.mrb[0].mxu0
  %594 = vmatprep.mubr.bf16.mxu0 %v455
  %595 = vmatmul.mubr.bf16.gmra.mrb[0].mxu0 %v299
  %v596 = vpop.f32.mrb[0].mxu0
  %v597 = vadd.f32 %v103, %v596
  %v598 = vpop.f32.mrb[0].mxu0
  %v599 = vpop.f32.mrb[0].mxu0
  %v600 = vadd.f32 %v103, %v599
  %v601 = vpop.f32.mrb[0].mxu0
  %602 = vmatprep.mubr.bf16.mxu0 %v458
  %603 = vmatmul.mubr.bf16.gmra.mrb[0].mxu0 %v301
  %v604 = vpop.f32.mrb[0].mxu0
  %v605 = vadd.f32 %v103, %v604
  %v606 = vpop.f32.mrb[0].mxu0
  %v607 = vpop.f32.mrb[0].mxu0
  %v608 = vadd.f32 %v103, %v607
  %v609 = vpop.f32.mrb[0].mxu0
  %610 = vmatprep.mubr.bf16.mxu0 %v461
  %611 = vmatmul.mubr.bf16.gmra.mrb[0].mxu0 %v303
  %v612 = vpop.f32.mrb[0].mxu0
  %v613 = vadd.f32 %v103, %v612
  %v614 = vpop.f32.mrb[0].mxu0
  %v615 = vpop.f32.mrb[0].mxu0
  %v616 = vadd.f32 %v103, %v615
  %v617 = vpop.f32.mrb[0].mxu0
  %618 = vmatprep.mubr.bf16.mxu0 %v464
  %619 = vmatmul.mubr.bf16.gmra.mrb[0].mxu0 %v305
  %v620 = vpop.f32.mrb[0].mxu0
  %v621 = vadd.f32 %v103, %v620
  %v622 = vpop.f32.mrb[0].mxu0
  %v623 = vpop.f32.mrb[0].mxu0
  %v624 = vadd.f32 %v103, %v623
  %v625 = vpop.f32.mrb[0].mxu0
  %626 = vmatprep.mubr.bf16.mxu0 %v467
  %627 = vmatmul.mubr.bf16.gmra.mrb[0].mxu0 %v307
  %v628 = vpop.f32.mrb[0].mxu0
  %v629 = vadd.f32 %v103, %v628
  %v630 = vpop.f32.mrb[0].mxu0
  %v631 = vpop.f32.mrb[0].mxu0
  %v632 = vadd.f32 %v103, %v631
  %v633 = vpop.f32.mrb[0].mxu0
  %634 = vmatprep.mubr.bf16.mxu0 %v470
  %635 = vmatmul.mubr.bf16.gmra.mrb[0].mxu0 %v309
  %v636 = vpop.f32.mrb[0].mxu0
  %v637 = vadd.f32 %v103, %v636
  %v638 = vpop.f32.mrb[0].mxu0
  %v639 = vpop.f32.mrb[0].mxu0
  %v640 = vadd.f32 %v103, %v639
  %v641 = vpop.f32.mrb[0].mxu0
  %642 = vmatprep.mubr.bf16.mxu0 %v473
  %643 = vmatmul.mubr.bf16.gmra.mrb[0].mxu0 %v311
  %v644 = vpop.f32.mrb[0].mxu0
  %v645 = vadd.f32 %v103, %v644
  %v646 = vpop.f32.mrb[0].mxu0
  %v647 = vpop.f32.mrb[0].mxu0
  %v648 = vadd.f32 %v103, %v647
  %v649 = vpop.f32.mrb[0].mxu0
  %650 = vmatprep.mubr.bf16.mxu0 %v476
  %651 = vmatmul.mubr.bf16.gmra.mrb[0].mxu0 %v313
  %v652 = vpop.f32.mrb[0].mxu0
  %v653 = vadd.f32 %v103, %v652
  %v654 = vpop.f32.mrb[0].mxu0
  %v655 = vpop.f32.mrb[0].mxu0
  %v656 = vadd.f32 %v103, %v655
  %v657 = vpop.f32.mrb[0].mxu0
  %658 = vmatprep.mubr.bf16.mxu0 %v479
  %659 = vmatmul.mubr.bf16.gmra.mrb[0].mxu0 %v315
  %v660 = vpop.f32.mrb[0].mxu0
  %v661 = vadd.f32 %v103, %v660
  %v662 = vpop.f32.mrb[0].mxu0
  %v663 = vpop.f32.mrb[0].mxu0
  %v664 = vadd.f32 %v103, %v663
  %v665 = vpop.f32.mrb[0].mxu0
  %666 = vmatprep.mubr.bf16.mxu0 %v482
  %667 = vmatmul.mubr.bf16.gmra.mrb[0].mxu0 %v317
  %v668 = vpop.f32.mrb[0].mxu0
  %v669 = vadd.f32 %v103, %v668
  %v670 = vpop.f32.mrb[0].mxu0
  %v671 = vpop.f32.mrb[0].mxu0
  %v672 = vadd.f32 %v103, %v671
  %v673 = vpop.f32.mrb[0].mxu0
  %674 = vmatprep.mubr.bf16.mxu0 %v485
  %675 = vmatmul.mubr.bf16.gmra.mrb[0].mxu0 %v319
  %v676 = vpop.f32.mrb[0].mxu0
  %v677 = vadd.f32 %v103, %v676
  %v678 = vpop.f32.mrb[0].mxu0
  %v679 = vpop.f32.mrb[0].mxu0
  %v680 = vadd.f32 %v103, %v679
  %v681 = vpop.f32.mrb[0].mxu0
  %682 = vmatprep.mubr.bf16.mxu0 %v488
  %683 = vmatmul.mubr.bf16.gmra.mrb[0].mxu0 %v321
  %v684 = vpop.f32.mrb[0].mxu0
  %v685 = vadd.f32 %v103, %v684
  %v686 = vpop.f32.mrb[0].mxu0
  %v687 = vpop.f32.mrb[0].mxu0
  %v688 = vadd.f32 %v103, %v687
  %v689 = vpop.f32.mrb[0].mxu0
  %690 = vmatprep.mubr.bf16.mxu0 %v491
  %691 = vmatmul.mubr.bf16.gmra.mrb[0].mxu0 %v323
  %v692 = vpop.f32.mrb[0].mxu0
  %v693 = vadd.f32 %v103, %v692
  %v694 = vpop.f32.mrb[0].mxu0
  %v695 = vpop.f32.mrb[0].mxu0
  %v696 = vadd.f32 %v103, %v695
  %v697 = vpop.f32.mrb[0].mxu0
  %698 = vmatprep.mubr.bf16.mxu0 %v494
  %699 = vmatmul.mubr.bf16.gmra.mrb[0].mxu0 %v325
  %v700 = vpop.f32.mrb[0].mxu0
  %v701 = vadd.f32 %v103, %v700
  %v702 = vpop.f32.mrb[0].mxu0
  %v703 = vpop.f32.mrb[0].mxu0
  %v704 = vadd.f32 %v103, %v703
  %v705 = vpop.f32.mrb[0].mxu0
  %706 = vmatprep.mubr.bf16.mxu0 %v497
  %707 = vmatmul.mubr.bf16.gmra.mrb[0].mxu0 %v327
  %v708 = vpop.f32.mrb[0].mxu0
  %v709 = vadd.f32 %v103, %v708
  %v710 = vpop.f32.mrb[0].mxu0
  %v711 = vpop.f32.mrb[0].mxu0
  %v712 = vadd.f32 %v103, %v711
  %v713 = vpop.f32.mrb[0].mxu0
  %714 = vmatprep.mubr.bf16.mxu0 %v500
  %715 = vmatmul.mubr.bf16.gmra.mrb[0].mxu0 %v329
  %v716 = vpop.f32.mrb[0].mxu0
  %v717 = vadd.f32 %v103, %v716
  %v718 = vpop.f32.mrb[0].mxu0
  %v719 = vpop.f32.mrb[0].mxu0
  %v720 = vadd.f32 %v103, %v719
  %v721 = vpop.f32.mrb[0].mxu0
  %722 = vmatprep.mubr.bf16.mxu0 %v503
  %723 = vmatmul.mubr.bf16.gmra.mrb[0].mxu0 %v331
  %v724 = vpop.f32.mrb[0].mxu0
  %v725 = vadd.f32 %v103, %v724
  %v726 = vpop.f32.mrb[0].mxu0
  %v727 = vpop.f32.mrb[0].mxu0
  %v728 = vadd.f32 %v103, %v727
  %v729 = vpop.f32.mrb[0].mxu0
  %730 = vmatprep.mubr.bf16.mxu0 %v506
  %731 = vmatmul.mubr.bf16.gmra.mrb[0].mxu0 %v333
  %v732 = vpop.f32.mrb[0].mxu0
  %v733 = vadd.f32 %v103, %v732
  %v734 = vpop.f32.mrb[0].mxu0
  %v735 = vpop.f32.mrb[0].mxu0
  %v736 = vadd.f32 %v103, %v735
  %v737 = vpop.f32.mrb[0].mxu0
  %738 = vmatprep.mubr.bf16.mxu0 %v509
  %739 = vmatmul.mubr.bf16.gmra.mrb[0].mxu0 %v335
  %v740 = vpop.f32.mrb[0].mxu0
  %v741 = vadd.f32 %v103, %v740
  %v742 = vpop.f32.mrb[0].mxu0
  %v743 = vpop.f32.mrb[0].mxu0
  %v744 = vadd.f32 %v103, %v743
  %v745 = vpop.f32.mrb[0].mxu0
  %746 = vmatprep.mubr.bf16.mxu0 %v512
  %747 = vmatmul.mubr.bf16.gmra.mrb[0].mxu0 %v337
  %v748 = vpop.f32.mrb[0].mxu0
  %v749 = vadd.f32 %v103, %v748
  %v750 = vpop.f32.mrb[0].mxu0
  %v751 = vpop.f32.mrb[0].mxu0
  %v752 = vadd.f32 %v103, %v751
  %v753 = vpop.f32.mrb[0].mxu0
  %754 = vmatprep.mubr.bf16.mxu0 %v515
  %755 = vmatmul.mubr.bf16.gmra.mrb[0].mxu0 %v339
  %v756 = vpop.f32.mrb[0].mxu0
  %v757 = vadd.f32 %v103, %v756
  %v758 = vpop.f32.mrb[0].mxu0
  %v759 = vpop.f32.mrb[0].mxu0
  %v760 = vadd.f32 %v103, %v759
  %v761 = vpop.f32.mrb[0].mxu0
  %762 = vmatprep.mubr.bf16.mxu0 %v518
  %763 = vmatmul.mubr.bf16.gmra.mrb[0].mxu0 %v341
  %v764 = vpop.f32.mrb[0].mxu0
  %v765 = vadd.f32 %v103, %v764
  %v766 = vpop.f32.mrb[0].mxu0
  %v767 = vpop.f32.mrb[0].mxu0
  %v768 = vadd.f32 %v103, %v767
  %v769 = vpop.f32.mrb[0].mxu0
  %770 = vmatprep.mubr.bf16.mxu0 %v521
  %771 = vmatmul.mubr.bf16.gmra.mrb[0].mxu0 %v343
  %v772 = vpop.f32.mrb[0].mxu0
  %v773 = vadd.f32 %v103, %v772
  %v774 = vpop.f32.mrb[0].mxu0
  %v775 = vpop.f32.mrb[0].mxu0
  %v776 = vadd.f32 %v103, %v775
  %v777 = vpop.f32.mrb[0].mxu0
  %778 = vmatprep.mubr.bf16.mxu0 %v524
  %779 = vmatmul.mubr.bf16.gmra.mrb[0].mxu0 %v345
  %v780 = vpop.f32.mrb[0].mxu0
  %v781 = vadd.f32 %v103, %v780
  %v782 = vpop.f32.mrb[0].mxu0
  %v783 = vpop.f32.mrb[0].mxu0
  %v784 = vadd.f32 %v103, %v783
  %v785 = vpop.f32.mrb[0].mxu0
  %786 = vmatprep.mubr.bf16.mxu0 %v527
  %787 = vmatmul.mubr.bf16.gmra.mrb[0].mxu0 %v347
  %v788 = vpop.f32.mrb[0].mxu0
  %v789 = vadd.f32 %v103, %v788
  %v790 = vpop.f32.mrb[0].mxu0
  %v791 = vpop.f32.mrb[0].mxu0
  %v792 = vadd.f32 %v103, %v791
  %v793 = vpop.f32.mrb[0].mxu0
  %794 = vmatprep.mubr.bf16.mxu0 %v530
  %795 = vmatmul.mubr.bf16.gmra.mrb[0].mxu0 %v349
  %v796 = vpop.f32.mrb[0].mxu0
  %v797 = vadd.f32 %v103, %v796
  %v798 = vpop.f32.mrb[0].mxu0
  %v799 = vpop.f32.mrb[0].mxu0
  %v800 = vadd.f32 %v103, %v799
  %v801 = vpop.f32.mrb[0].mxu0
  %802 = vmatprep.mubr.bf16.mxu0 %v533
  %803 = vmatmul.mubr.bf16.gmra.mrb[0].mxu0 %v351
  %v804 = vpop.f32.mrb[0].mxu0
  %v805 = vadd.f32 %v103, %v804
  %v806 = vpop.f32.mrb[0].mxu0
  %v807 = vpop.f32.mrb[0].mxu0
  %v808 = vadd.f32 %v103, %v807
  %v809 = vpop.f32.mrb[0].mxu0
  %810 = vmatprep.mubr.bf16.mxu0 %v536
  %811 = vmatmul.mubr.bf16.gmra.mrb[0].mxu0 %v353
  %v812 = vpop.f32.mrb[0].mxu0
  %v813 = vadd.f32 %v103, %v812
  %v814 = vpop.f32.mrb[0].mxu0
  %v815 = vpop.f32.mrb[0].mxu0
  %v816 = vadd.f32 %v103, %v815
  %v817 = vpop.f32.mrb[0].mxu0
  %818 = vmatprep.mubr.bf16.mxu0 %v539
  %819 = vmatmul.mubr.bf16.gmra.mrb[0].mxu0 %v355
  %v820 = vpop.f32.mrb[0].mxu0
  %v821 = vadd.f32 %v103, %v820
  %v822 = vpop.f32.mrb[0].mxu0
  %v823 = vpop.f32.mrb[0].mxu0
  %v824 = vadd.f32 %v103, %v823
  %v825 = vpop.f32.mrb[0].mxu0
  %826 = vmatprep.mubr.bf16.mxu0 %v542
  %827 = vmatmul.mubr.bf16.gmra.mrb[0].mxu0 %v357
  %v828 = vpop.f32.mrb[0].mxu0
  %v829 = vadd.f32 %v103, %v828
  %v830 = vpop.f32.mrb[0].mxu0
  %v831 = vpop.f32.mrb[0].mxu0
  %v832 = vadd.f32 %v103, %v831
  %v833 = vpop.f32.mrb[0].mxu0
  %834 = vmatprep.mubr.bf16.mxu0 %v545
  %835 = vmatmul.mubr.bf16.gmra.mrb[0].mxu0 %v359
  %v836 = vpop.f32.mrb[0].mxu0
  %v837 = vadd.f32 %v103, %v836
  %v838 = vpop.f32.mrb[0].mxu0
  %v839 = vpop.f32.mrb[0].mxu0
  %v840 = vadd.f32 %v103, %v839
  %v841 = vpop.f32.mrb[0].mxu0
  %842 = vdwg.mxu0
  %v843 = vmax.f32 %v589, 0.0
  %v844 = vmax.f32 %v592, 0.0
  %v845 = vmax.f32 %v597, 0.0
  %v846 = vmax.f32 %v600, 0.0
  %v847 = vmax.f32 %v605, 0.0
  %v848 = vmax.f32 %v608, 0.0
  %v849 = vmax.f32 %v613, 0.0
  %v850 = vmax.f32 %v616, 0.0
  %v851 = vmax.f32 %v621, 0.0
  %v852 = vmax.f32 %v624, 0.0
  %v853 = vmax.f32 %v629, 0.0
  %v854 = vmax.f32 %v632, 0.0
  %v855 = vmax.f32 %v637, 0.0
  %v856 = vmax.f32 %v640, 0.0
  %v857 = vmax.f32 %v645, 0.0
  %v858 = vmax.f32 %v648, 0.0
  %v859 = vmax.f32 %v653, 0.0
  %v860 = vmax.f32 %v656, 0.0
  %v861 = vmax.f32 %v661, 0.0
  %v862 = vmax.f32 %v664, 0.0
  %v863 = vmax.f32 %v669, 0.0
  %v864 = vmax.f32 %v672, 0.0
  %v865 = vmax.f32 %v677, 0.0
  %v866 = vmax.f32 %v680, 0.0
  %v867 = vmax.f32 %v685, 0.0
  %v868 = vmax.f32 %v688, 0.0
  %v869 = vmax.f32 %v693, 0.0
  %v870 = vmax.f32 %v696, 0.0
  %v871 = vmax.f32 %v701, 0.0
  %v872 = vmax.f32 %v704, 0.0
  %v873 = vmax.f32 %v709, 0.0
  %v874 = vmax.f32 %v712, 0.0
  %v875 = vmax.f32 %v717, 0.0
  %v876 = vmax.f32 %v720, 0.0
  %v877 = vmax.f32 %v725, 0.0
  %v878 = vmax.f32 %v728, 0.0
  %v879 = vmax.f32 %v733, 0.0
  %v880 = vmax.f32 %v736, 0.0
  %v881 = vmax.f32 %v741, 0.0
  %v882 = vmax.f32 %v744, 0.0
  %v883 = vmax.f32 %v749, 0.0
  %v884 = vmax.f32 %v752, 0.0
  %v885 = vmax.f32 %v757, 0.0
  %v886 = vmax.f32 %v760, 0.0
  %v887 = vmax.f32 %v765, 0.0
  %v888 = vmax.f32 %v768, 0.0
  %v889 = vmax.f32 %v773, 0.0
  %v890 = vmax.f32 %v776, 0.0
  %v891 = vmax.f32 %v781, 0.0
  %v892 = vmax.f32 %v784, 0.0
  %v893 = vmax.f32 %v789, 0.0
  %v894 = vmax.f32 %v792, 0.0
  %v895 = vmax.f32 %v797, 0.0
  %v896 = vmax.f32 %v800, 0.0
  %v897 = vmax.f32 %v805, 0.0
  %v898 = vmax.f32 %v808, 0.0
  %v899 = vmax.f32 %v813, 0.0
  %v900 = vmax.f32 %v816, 0.0
  %v901 = vmax.f32 %v821, 0.0
  %v902 = vmax.f32 %v824, 0.0
  %v903 = vmax.f32 %v829, 0.0
  %v904 = vmax.f32 %v832, 0.0
  %v905 = vmax.f32 %v837, 0.0
  %v906 = vmax.f32 %v840, 0.0
  %v907 = vpack.c.bf16 %v844, %v843
  %v908 = vpack.c.bf16 %v846, %v845
  %v909 = vpack.c.bf16 %v848, %v847
  %v910 = vpack.c.bf16 %v850, %v849
  %v911 = vpack.c.bf16 %v852, %v851
  %v912 = vpack.c.bf16 %v854, %v853
  %v913 = vpack.c.bf16 %v856, %v855
  %v914 = vpack.c.bf16 %v858, %v857
  %v915 = vpack.c.bf16 %v860, %v859
  %v916 = vpack.c.bf16 %v862, %v861
  %v917 = vpack.c.bf16 %v864, %v863
  %v918 = vpack.c.bf16 %v866, %v865
  %v919 = vpack.c.bf16 %v868, %v867
  %v920 = vpack.c.bf16 %v870, %v869
  %v921 = vpack.c.bf16 %v872, %v871
  %v922 = vpack.c.bf16 %v874, %v873
  %v923 = vpack.c.bf16 %v876, %v875
  %v924 = vpack.c.bf16 %v878, %v877
  %v925 = vpack.c.bf16 %v880, %v879
  %v926 = vpack.c.bf16 %v882, %v881
  %v927 = vpack.c.bf16 %v884, %v883
  %v928 = vpack.c.bf16 %v886, %v885
  %v929 = vpack.c.bf16 %v888, %v887
  %v930 = vpack.c.bf16 %v890, %v889
  %v931 = vpack.c.bf16 %v892, %v891
  %v932 = vpack.c.bf16 %v894, %v893
  %v933 = vpack.c.bf16 %v896, %v895
  %v934 = vpack.c.bf16 %v898, %v897
  %v935 = vpack.c.bf16 %v900, %v899
  %v936 = vpack.c.bf16 %v902, %v901
  %v937 = vpack.c.bf16 %v904, %v903
  %v938 = vpack.c.bf16 %v906, %v905
  %v971 = vunpack.c.l.b16 %v907
  %v972 = vunpack.c.h.b16 %v907
  %v973 = vunpack.c.l.b16 %v908
  %v974 = vunpack.c.h.b16 %v908
  %v975 = vunpack.c.l.b16 %v909
  %v976 = vunpack.c.h.b16 %v909
  %v977 = vunpack.c.l.b16 %v910
  %v978 = vunpack.c.h.b16 %v910
  %v979 = vunpack.c.l.b16 %v911
  %v980 = vunpack.c.h.b16 %v911
  %v981 = vunpack.c.l.b16 %v912
  %v982 = vunpack.c.h.b16 %v912
  %v983 = vunpack.c.l.b16 %v913
  %v984 = vunpack.c.h.b16 %v913
  %v985 = vunpack.c.l.b16 %v914
  %v986 = vunpack.c.h.b16 %v914
  %v987 = vunpack.c.l.b16 %v915
  %v988 = vunpack.c.h.b16 %v915
  %v989 = vunpack.c.l.b16 %v916
  %v990 = vunpack.c.h.b16 %v916
  %v991 = vunpack.c.l.b16 %v917
  %v992 = vunpack.c.h.b16 %v917
  %v993 = vunpack.c.l.b16 %v918
  %v994 = vunpack.c.h.b16 %v918
  %v995 = vunpack.c.l.b16 %v919
  %v996 = vunpack.c.h.b16 %v919
  %v997 = vunpack.c.l.b16 %v920
  %v998 = vunpack.c.h.b16 %v920
  %v999 = vunpack.c.l.b16 %v921
  %v1000 = vunpack.c.h.b16 %v921
  %v1001 = vunpack.c.l.b16 %v922
  %v1002 = vunpack.c.h.b16 %v922
  %v1003 = vunpack.c.l.b16 %v923
  %v1004 = vunpack.c.h.b16 %v923
  %v1005 = vunpack.c.l.b16 %v924
  %v1006 = vunpack.c.h.b16 %v924
  %v1007 = vunpack.c.l.b16 %v925
  %v1008 = vunpack.c.h.b16 %v925
  %v1009 = vunpack.c.l.b16 %v926
  %v1010 = vunpack.c.h.b16 %v926
  %v1011 = vunpack.c.l.b16 %v927
  %v1012 = vunpack.c.h.b16 %v927
  %v1013 = vunpack.c.l.b16 %v928
  %v1014 = vunpack.c.h.b16 %v928
  %v1015 = vunpack.c.l.b16 %v929
  %v1016 = vunpack.c.h.b16 %v929
  %v1017 = vunpack.c.l.b16 %v930
  %v1018 = vunpack.c.h.b16 %v930
  %v1019 = vunpack.c.l.b16 %v931
  %v1020 = vunpack.c.h.b16 %v931
  %v1021 = vunpack.c.l.b16 %v932
  %v1022 = vunpack.c.h.b16 %v932
  %v1023 = vunpack.c.l.b16 %v933
  %v1024 = vunpack.c.h.b16 %v933
  %v1025 = vunpack.c.l.b16 %v934
  %v1026 = vunpack.c.h.b16 %v934
  %v1027 = vunpack.c.l.b16 %v935
  %v1028 = vunpack.c.h.b16 %v935
  %v1029 = vunpack.c.l.b16 %v936
  %v1030 = vunpack.c.h.b16 %v936
  %v1031 = vunpack.c.l.b16 %v937
  %v1032 = vunpack.c.h.b16 %v937
  %v1033 = vunpack.c.l.b16 %v938
  %v1034 = vunpack.c.h.b16 %v938
  %v1035 = vpack.c.b16 %v971, %v971
  %v1036 = vpack.c.b16 %v972, %v972
  %v1037 = vpack.c.b16 %v973, %v973
  %v1038 = vpack.c.b16 %v974, %v974
  %v1039 = vpack.c.b16 %v975, %v975
  %v1040 = vpack.c.b16 %v976, %v976
  %v1041 = vpack.c.b16 %v977, %v977
  %v1042 = vpack.c.b16 %v978, %v978
  %v1043 = vpack.c.b16 %v979, %v979
  %v1044 = vpack.c.b16 %v980, %v980
  %v1045 = vpack.c.b16 %v981, %v981
  %v1046 = vpack.c.b16 %v982, %v982
  %v1047 = vpack.c.b16 %v983, %v983
  %v1048 = vpack.c.b16 %v984, %v984
  %v1049 = vpack.c.b16 %v985, %v985
  %v1050 = vpack.c.b16 %v986, %v986
  %v1051 = vpack.c.b16 %v987, %v987
  %v1052 = vpack.c.b16 %v988, %v988
  %v1053 = vpack.c.b16 %v989, %v989
  %v1054 = vpack.c.b16 %v990, %v990
  %v1055 = vpack.c.b16 %v991, %v991
  %v1056 = vpack.c.b16 %v992, %v992
  %v1057 = vpack.c.b16 %v993, %v993
  %v1058 = vpack.c.b16 %v994, %v994
  %v1059 = vpack.c.b16 %v995, %v995
  %v1060 = vpack.c.b16 %v996, %v996
  %v1061 = vpack.c.b16 %v997, %v997
  %v1062 = vpack.c.b16 %v998, %v998
  %v1063 = vpack.c.b16 %v999, %v999
  %v1064 = vpack.c.b16 %v1000, %v1000
  %v1065 = vpack.c.b16 %v1001, %v1001
  %v1066 = vpack.c.b16 %v1002, %v1002
  %v1067 = vpack.c.b16 %v1003, %v1003
  %v1068 = vpack.c.b16 %v1004, %v1004
  %v1069 = vpack.c.b16 %v1005, %v1005
  %v1070 = vpack.c.b16 %v1006, %v1006
  %v1071 = vpack.c.b16 %v1007, %v1007
  %v1072 = vpack.c.b16 %v1008, %v1008
  %v1073 = vpack.c.b16 %v1009, %v1009
  %v1074 = vpack.c.b16 %v1010, %v1010
  %v1075 = vpack.c.b16 %v1011, %v1011
  %v1076 = vpack.c.b16 %v1012, %v1012
  %v1077 = vpack.c.b16 %v1013, %v1013
  %v1078 = vpack.c.b16 %v1014, %v1014
  %v1079 = vpack.c.b16 %v1015, %v1015
  %v1080 = vpack.c.b16 %v1016, %v1016
  %v1081 = vpack.c.b16 %v1017, %v1017
  %v1082 = vpack.c.b16 %v1018, %v1018
  %v1083 = vpack.c.b16 %v1019, %v1019
  %v1084 = vpack.c.b16 %v1020, %v1020
  %v1085 = vpack.c.b16 %v1021, %v1021
  %v1086 = vpack.c.b16 %v1022, %v1022
  %v1087 = vpack.c.b16 %v1023, %v1023
  %v1088 = vpack.c.b16 %v1024, %v1024
  %v1089 = vpack.c.b16 %v1025, %v1025
  %v1090 = vpack.c.b16 %v1026, %v1026
  %v1091 = vpack.c.b16 %v1027, %v1027
  %v1092 = vpack.c.b16 %v1028, %v1028
  %v1093 = vpack.c.b16 %v1029, %v1029
  %v1094 = vpack.c.b16 %v1030, %v1030
  %v1095 = vpack.c.b16 %v1031, %v1031
  %v1096 = vpack.c.b16 %v1032, %v1032
  %v1097 = vpack.c.b16 %v1033, %v1033
  %v1098 = vpack.c.b16 %v1034, %v1034
  %vm1163 = vcmask 519168
  %1164 = vst.msk [vmem:[%s3] sm:$0xf] %vm1163, %v1035
  %1165 = vst.msk [vmem:[%s3 + $0x4] sm:$0xf] %vm1163, %v1036
  %1166 = vst.msk [vmem:[%s3 + $0x8] sm:$0xf] %vm1163, %v1037
  %1167 = vst.msk [vmem:[%s3 + $0xc] sm:$0xf] %vm1163, %v1038
  %1168 = vst.msk [vmem:[%s3 + $0x10] sm:$0xf] %vm1163, %v1039
  %1169 = vst.msk [vmem:[%s3 + $0x14] sm:$0xf] %vm1163, %v1040
  %1170 = vst.msk [vmem:[%s3 + $0x18] sm:$0xf] %vm1163, %v1041
  %1171 = vst.msk [vmem:[%s3 + $0x1c] sm:$0xf] %vm1163, %v1042
  %1172 = vst.msk [vmem:[%s3 + $0x20] sm:$0xf] %vm1163, %v1043
  %1173 = vst.msk [vmem:[%s3 + $0x24] sm:$0xf] %vm1163, %v1044
  %1174 = vst.msk [vmem:[%s3 + $0x28] sm:$0xf] %vm1163, %v1045
  %1175 = vst.msk [vmem:[%s3 + $0x2c] sm:$0xf] %vm1163, %v1046
  %1176 = vst.msk [vmem:[%s3 + $0x30] sm:$0xf] %vm1163, %v1047
  %1177 = vst.msk [vmem:[%s3 + $0x34] sm:$0xf] %vm1163, %v1048
  %1178 = vst.msk [vmem:[%s3 + $0x38] sm:$0xf] %vm1163, %v1049
  %1179 = vst.msk [vmem:[%s3 + $0x3c] sm:$0xf] %vm1163, %v1050
  %1180 = vst.msk [vmem:[%s3 + $0x40] sm:$0xf] %vm1163, %v1051
  %1181 = vst.msk [vmem:[%s3 + $0x44] sm:$0xf] %vm1163, %v1052
  %1182 = vst.msk [vmem:[%s3 + $0x48] sm:$0xf] %vm1163, %v1053
  %1183 = vst.msk [vmem:[%s3 + $0x4c] sm:$0xf] %vm1163, %v1054
  %1184 = vst.msk [vmem:[%s3 + $0x50] sm:$0xf] %vm1163, %v1055
  %1185 = vst.msk [vmem:[%s3 + $0x54] sm:$0xf] %vm1163, %v1056
  %1186 = vst.msk [vmem:[%s3 + $0x58] sm:$0xf] %vm1163, %v1057
  %1187 = vst.msk [vmem:[%s3 + $0x5c] sm:$0xf] %vm1163, %v1058
  %1188 = vst.msk [vmem:[%s3 + $0x60] sm:$0xf] %vm1163, %v1059
  %1189 = vst.msk [vmem:[%s3 + $0x64] sm:$0xf] %vm1163, %v1060
  %1190 = vst.msk [vmem:[%s3 + $0x68] sm:$0xf] %vm1163, %v1061
  %1191 = vst.msk [vmem:[%s3 + $0x6c] sm:$0xf] %vm1163, %v1062
  %1192 = vst.msk [vmem:[%s3 + $0x70] sm:$0xf] %vm1163, %v1063
  %1193 = vst.msk [vmem:[%s3 + $0x74] sm:$0xf] %vm1163, %v1064
  %1194 = vst.msk [vmem:[%s3 + $0x78] sm:$0xf] %vm1163, %v1065
  %1195 = vst.msk [vmem:[%s3 + $0x7c] sm:$0xf] %vm1163, %v1066
  %1196 = vst.msk [vmem:[%s3 + $0x80] sm:$0xf] %vm1163, %v1067
  %1197 = vst.msk [vmem:[%s3 + $0x84] sm:$0xf] %vm1163, %v1068
  %1198 = vst.msk [vmem:[%s3 + $0x88] sm:$0xf] %vm1163, %v1069
  %1199 = vst.msk [vmem:[%s3 + $0x8c] sm:$0xf] %vm1163, %v1070
  %1200 = vst.msk [vmem:[%s3 + $0x90] sm:$0xf] %vm1163, %v1071
  %1201 = vst.msk [vmem:[%s3 + $0x94] sm:$0xf] %vm1163, %v1072
  %1202 = vst.msk [vmem:[%s3 + $0x98] sm:$0xf] %vm1163, %v1073
  %1203 = vst.msk [vmem:[%s3 + $0x9c] sm:$0xf] %vm1163, %v1074
  %1204 = vst.msk [vmem:[%s3 + $0xa0] sm:$0xf] %vm1163, %v1075
  %1205 = vst.msk [vmem:[%s3 + $0xa4] sm:$0xf] %vm1163, %v1076
  %1206 = vst.msk [vmem:[%s3 + $0xa8] sm:$0xf] %vm1163, %v1077
  %1207 = vst.msk [vmem:[%s3 + $0xac] sm:$0xf] %vm1163, %v1078
  %1208 = vst.msk [vmem:[%s3 + $0xb0] sm:$0xf] %vm1163, %v1079
  %1209 = vst.msk [vmem:[%s3 + $0xb4] sm:$0xf] %vm1163, %v1080
  %1210 = vst.msk [vmem:[%s3 + $0xb8] sm:$0xf] %vm1163, %v1081
  %1211 = vst.msk [vmem:[%s3 + $0xbc] sm:$0xf] %vm1163, %v1082
  %1212 = vst.msk [vmem:[%s3 + $0xc0] sm:$0xf] %vm1163, %v1083
  %1213 = vst.msk [vmem:[%s3 + $0xc4] sm:$0xf] %vm1163, %v1084
  %1214 = vst.msk [vmem:[%s3 + $0xc8] sm:$0xf] %vm1163, %v1085
  %1215 = vst.msk [vmem:[%s3 + $0xcc] sm:$0xf] %vm1163, %v1086
  %1216 = vst.msk [vmem:[%s3 + $0xd0] sm:$0xf] %vm1163, %v1087
  %1217 = vst.msk [vmem:[%s3 + $0xd4] sm:$0xf] %vm1163, %v1088
  %1218 = vst.msk [vmem:[%s3 + $0xd8] sm:$0xf] %vm1163, %v1089
  %1219 = vst.msk [vmem:[%s3 + $0xdc] sm:$0xf] %vm1163, %v1090
  %1220 = vst.msk [vmem:[%s3 + $0xe0] sm:$0xf] %vm1163, %v1091
  %1221 = vst.msk [vmem:[%s3 + $0xe4] sm:$0xf] %vm1163, %v1092
  %1222 = vst.msk [vmem:[%s3 + $0xe8] sm:$0xf] %vm1163, %v1093
  %1223 = vst.msk [vmem:[%s3 + $0xec] sm:$0xf] %vm1163, %v1094
  %1224 = vst.msk [vmem:[%s3 + $0xf0] sm:$0xf] %vm1163, %v1095
  %1225 = vst.msk [vmem:[%s3 + $0xf4] sm:$0xf] %vm1163, %v1096
  %1226 = vst.msk [vmem:[%s3 + $0xf8] sm:$0xf] %vm1163, %v1097
  %1227 = vst.msk [vmem:[%s3 + $0xfc] sm:$0xf] %vm1163, %v1098
  // Predicated region
  $region14: #{tpu_custom_call.1} parent=0 // pred_check
    _
  $region15: #{tpu_custom_call.1} parent=0 // pred_check_branch
    %1229 = sbr.rel (0) target = $region17
  $region16: #{tpu_custom_call.1} parent=0 // pred_region
    _
  $region17: #{tpu_custom_call.1} parent=0 // pred_fallthru
    _
  // Predicated region
  $region18: #{tpu_custom_call.1} parent=0 // pred_check
    _
  $region19: #{tpu_custom_call.1} parent=0 // pred_check_branch
    %1231 = sbr.rel (0) target = $region21
  $region20: #{tpu_custom_call.1} parent=0 // pred_region
    _
  $region21: #{tpu_custom_call.1} parent=0 // pred_fallthru
    _

</llo_original>
